<compile_context>
chip_gen: v7x
topology: tpu7x:2x2x1
jax: 0.10.0
libtpu: 0.0.40
codegen_flags: <defaults>
</compile_context>

<pallas_src>
import jax
import jax.numpy as jnp
from jax.experimental import pallas as pl
from jax.experimental.pallas import tpu as pltpu

NEG_SLOPE = 0.01  # nn.LeakyReLU default


def _leaky(v):
    return jnp.where(v > 0, v, NEG_SLOPE * v)


def _resident(a):
    """Whole-array block, same index every grid step (fetched once, stays in VMEM)."""
    return pl.BlockSpec(a.shape, lambda i: (0,) * a.ndim)


# ---------------------------------------------------------------------------
# Kernel 1: point-cloud decoder MLP, wide last layer streamed over the N axis.
# ---------------------------------------------------------------------------
def points_mlp_kernel(x_ref, w1_ref, b1_ref, w2_ref, b2_ref, w3_ref, b3_ref, o_ref):
    # Tiny trunk — recomputed each grid step (cheaper than a carried scratch and
    # keeps the N axis stateless, hence "parallel" for megacore sharding).
    h = _leaky(jnp.dot(x_ref[...], w1_ref[...],
                       preferred_element_type=jnp.float32) + b1_ref[...])
    h = _leaky(jnp.dot(h, w2_ref[...],
                       preferred_element_type=jnp.float32) + b2_ref[...])
    # Wide layer: only a (nf1, tile_n) column slice of w3 is in VMEM at a time.
    o_ref[...] = jax.nn.sigmoid(
        jnp.dot(h, w3_ref[...], preferred_element_type=jnp.float32) + b3_ref[...])


def run_points_mlp(x, params, tile_n=512):
    (w1, b1), (w2, b2), (w3, b3) = params
    bz = x.shape[0]
    nf1, n_out = w3.shape
    tile_n = min(tile_n, n_out)
    grid = (pl.cdiv(n_out, tile_n),)
    return pl.pallas_call(
        points_mlp_kernel,
        out_shape=jax.ShapeDtypeStruct((bz, n_out), jnp.float32),
        grid=grid,
        in_specs=[
            _resident(x), _resident(w1), _resident(b1), _resident(w2), _resident(b2),
            pl.BlockSpec((nf1, tile_n), lambda i: (0, i)),   # stream w3 column blocks
            pl.BlockSpec((1, tile_n), lambda i: (0, i)),     # stream b3 column blocks
        ],
        out_specs=pl.BlockSpec((bz, tile_n), lambda i: (0, i)),  # lane-dense output
        compiler_params=pltpu.CompilerParams(dimension_semantics=("parallel",)),
    )(x, w1, b1, w2, b2, w3, b3)


# ---------------------------------------------------------------------------
# Kernel 2: fused pivot-point (6-wide) + cuboic (3-wide) head MLPs, one launch.
# ---------------------------------------------------------------------------
def ppv_cuboic_kernel(x_ref,
                      pw1, pb1, pw2, pb2, pw3, pb3,
                      cw1, cb1, cw2, cb2, cw3, cb3,
                      ppv_ref, cub_ref):
    xv = x_ref[...]
    hp = _leaky(jnp.dot(xv, pw1[...], preferred_element_type=jnp.float32) + pb1[...])
    hp = _leaky(jnp.dot(hp, pw2[...], preferred_element_type=jnp.float32) + pb2[...])
    ppv_ref[...] = jax.nn.sigmoid(
        jnp.dot(hp, pw3[...], preferred_element_type=jnp.float32) + pb3[...])

    hc = _leaky(jnp.dot(xv, cw1[...], preferred_element_type=jnp.float32) + cb1[...])
    hc = _leaky(jnp.dot(hc, cw2[...], preferred_element_type=jnp.float32) + cb2[...])
    cub_ref[...] = jax.nn.sigmoid(
        jnp.dot(hc, cw3[...], preferred_element_type=jnp.float32) + cb3[...])


def run_ppv_cuboic(x, ppv_params, cuboic_params):
    bz = x.shape[0]
    flat = []
    for (w, b) in list(ppv_params) + list(cuboic_params):
        flat += [w, b]
    return pl.pallas_call(
        ppv_cuboic_kernel,
        out_shape=(jax.ShapeDtypeStruct((bz, 6), jnp.float32),
                   jax.ShapeDtypeStruct((bz, 3), jnp.float32)),
        grid=(1,),
        in_specs=[_resident(x)] + [_resident(a) for a in flat],
        out_specs=(pl.BlockSpec((bz, 6), lambda i: (0, 0)),
                   pl.BlockSpec((bz, 3), lambda i: (0, 0))),
    )(x, *flat)


# ---------------------------------------------------------------------------
# Parameter construction (PyTorch nn.Linear init; weights stored as (in, out)).
# ---------------------------------------------------------------------------
def _init_layer(key, d_in, d_out):
    kw, kb = jax.random.split(key)
    scale = 1.0 / jnp.sqrt(jnp.float32(d_in))
    w = jax.random.uniform(kw, (d_in, d_out), jnp.float32, -scale, scale)
    b = jax.random.uniform(kb, (1, d_out), jnp.float32, -scale, scale)
    return w, b


def init_params(key, n_features=(256, 256), latent_dim=128, output_pts=2048):
    keys = jax.random.split(key, 9)
    nf0, nf1 = n_features
    model = [
        _init_layer(keys[0], latent_dim, nf0),
        _init_layer(keys[1], nf0, nf1),
        _init_layer(keys[2], nf1, 3 * output_pts),
    ]
    ppv = [
        _init_layer(keys[3], latent_dim, nf0),
        _init_layer(keys[4], nf0, nf1),
        _init_layer(keys[5], nf1, 6),
    ]
    cuboic = [
        _init_layer(keys[6], latent_dim, nf0),
        _init_layer(keys[7], nf0, nf1),
        _init_layer(keys[8], nf1, 3),
    ]
    return {"model": model, "ppv": ppv, "cuboic": cuboic,
            "latent_dim": latent_dim, "output_pts": output_pts}


# ---------------------------------------------------------------------------
# Forward (glue in plain JAX, hot paths in Pallas)
# ---------------------------------------------------------------------------
def decoder_forward(x, params):
    bz = x.shape[0]
    P = params["output_pts"]

    # model: (bz, latent) -> (bz, 3*P) -> view (bz, 3, P)
    pts_flat = run_points_mlp(x, params["model"])
    pts = pts_flat.reshape(bz, 3, P)

    # model_ppv + cuboic_model fused into one tiny kernel launch
    ppv, cuboic_x = run_ppv_cuboic(x, params["ppv"], params["cuboic"])
    pivot_point, central_point = ppv[:, :3], ppv[:, 3:]

    # pred_rot=False default: identity rotation per batch element
    cuboic_R = jnp.broadcast_to(jnp.eye(3, dtype=jnp.float32), (bz, 3, 3))
    return pts, pivot_point, central_point, cuboic_x, cuboic_R


# ---------------------------------------------------------------------------
# Pure-JAX reference for correctness check
# ---------------------------------------------------------------------------
def _mlp3_ref(v, ps):
    (w1, b1), (w2, b2), (w3, b3) = ps
    h = _leaky(v @ w1 + b1)
    h = _leaky(h @ w2 + b2)
    return jax.nn.sigmoid(h @ w3 + b3)


def reference_forward(x, params):
    bz = x.shape[0]
    P = params["output_pts"]
    pts = _mlp3_ref(x, params["model"]).reshape(bz, 3, P)
    ppv = _mlp3_ref(x, params["ppv"])
    cub = _mlp3_ref(x, params["cuboic"])
    R = jnp.broadcast_to(jnp.eye(3, dtype=jnp.float32), (bz, 3, 3))
    return pts, ppv[:, :3], ppv[:, 3:], cub, R


if __name__ == "__main__":
    # Small shapes consistent with the module: batch=2, latent_dim=32,
    # n_features=(32, 32), output_pts=128.
    bz, latent_dim, output_pts = 2, 32, 128
    n_features = (32, 32)

    key = jax.random.PRNGKey(0)
    kx, kp = jax.random.split(key)
    x = jax.random.normal(kx, (bz, latent_dim), jnp.float32)
    params = init_params(kp, n_features=n_features, latent_dim=latent_dim,
                         output_pts=output_pts)

    pts, pivot_point, central_point, cuboic_x, cuboic_R = decoder_forward(x, params)
    jax.block_until_ready((pts, pivot_point, central_point, cuboic_x, cuboic_R))

    r_pts, r_piv, r_cen, r_cub, r_R = reference_forward(x, params)
    assert pts.shape == (bz, 3, output_pts)
    assert pivot_point.shape == (bz, 3) and central_point.shape == (bz, 3)
    assert cuboic_x.shape == (bz, 3) and cuboic_R.shape == (bz, 3, 3)
    assert jnp.allclose(pts, r_pts, atol=1e-5)
    assert jnp.allclose(pivot_point, r_piv, atol=1e-5)
    assert jnp.allclose(central_point, r_cen, atol=1e-5)
    assert jnp.allclose(cuboic_x, r_cub, atol=1e-5)
    assert jnp.allclose(cuboic_R, r_R)

    print("KERNEL_OK")
</pallas_src>

<mosaic_0001>
module attributes {stable_mosaic.version = 11 : i64} {
  func.func @points_mlp_kernel(%arg0: i32, %arg1: memref<2x32xf32, #tpu.memory_space<vmem>>, %arg2: memref<32x32xf32, #tpu.memory_space<vmem>>, %arg3: memref<1x32xf32, #tpu.memory_space<vmem>>, %arg4: memref<32x32xf32, #tpu.memory_space<vmem>>, %arg5: memref<1x32xf32, #tpu.memory_space<vmem>>, %arg6: memref<32x384xf32, #tpu.memory_space<vmem>>, %arg7: memref<1x384xf32, #tpu.memory_space<vmem>>, %arg8: memref<2x384xf32, #tpu.memory_space<vmem>>) attributes {dimension_semantics = [#tpu.dimension_semantics<parallel>], iteration_bounds = array<i64: 1>, scalar_prefetch = 0 : i64, scratch_operands = 0 : i64, tpu.core_type = #tpu.core_type<tc>, window_params = [{pipeline_mode = #tpu.pipeline_mode<synchronous>, transform_indices = @transform_0, window_bounds = array<i64: 2, 32>}, {pipeline_mode = #tpu.pipeline_mode<synchronous>, transform_indices = @transform_1, window_bounds = array<i64: 32, 32>}, {pipeline_mode = #tpu.pipeline_mode<synchronous>, transform_indices = @transform_2, window_bounds = array<i64: 1, 32>}, {pipeline_mode = #tpu.pipeline_mode<synchronous>, transform_indices = @transform_3, window_bounds = array<i64: 32, 32>}, {pipeline_mode = #tpu.pipeline_mode<synchronous>, transform_indices = @transform_4, window_bounds = array<i64: 1, 32>}, {transform_indices = @transform_5, window_bounds = array<i64: 32, 384>}, {transform_indices = @transform_6, window_bounds = array<i64: 1, 384>}, {transform_indices = @transform_7, window_bounds = array<i64: 2, 384>}]} {
    %c0 = arith.constant 0 : index
    %c0_0 = arith.constant 0 : index
    %0 = vector.load %arg1[%c0, %c0_0] : memref<2x32xf32, #tpu.memory_space<vmem>>, vector<2x32xf32>
    %c0_1 = arith.constant 0 : index
    %c0_2 = arith.constant 0 : index
    %1 = vector.load %arg2[%c0_1, %c0_2] : memref<32x32xf32, #tpu.memory_space<vmem>>, vector<32x32xf32>
    %cst = arith.constant dense<0.000000e+00> : vector<2x32xf32>
    %2 = tpu.matmul %0, %1, %cst {dimension_numbers = #tpu.dot_dimension_numbers<[1], [0], [0], [1], [0, 0, 1, 1], [], []>} : vector<2x32xf32>, vector<32x32xf32>, vector<2x32xf32> -> vector<2x32xf32>
    %c0_3 = arith.constant 0 : index
    %c0_4 = arith.constant 0 : index
    %3 = vector.load %arg3[%c0_3, %c0_4] : memref<1x32xf32, #tpu.memory_space<vmem>>, vector<1x32xf32>
    %4 = vector.broadcast %3 : vector<1x32xf32> to vector<2x32xf32>
    %5 = arith.addf %2, %4 : vector<2x32xf32>
    %cst_5 = arith.constant 0.000000e+00 : f32
    %6 = vector.broadcast %cst_5 : f32 to vector<2x32xf32>
    %7 = arith.cmpf ogt, %5, %6 : vector<2x32xf32>
    %cst_6 = arith.constant 0.00999999977 : f32
    %8 = vector.broadcast %cst_6 : f32 to vector<2x32xf32>
    %9 = arith.mulf %8, %5 : vector<2x32xf32>
    %10 = arith.select %7, %5, %9 : vector<2x32xi1>, vector<2x32xf32>
    %c0_7 = arith.constant 0 : index
    %c0_8 = arith.constant 0 : index
    %11 = vector.load %arg4[%c0_7, %c0_8] : memref<32x32xf32, #tpu.memory_space<vmem>>, vector<32x32xf32>
    %cst_9 = arith.constant dense<0.000000e+00> : vector<2x32xf32>
    %12 = tpu.matmul %10, %11, %cst_9 {dimension_numbers = #tpu.dot_dimension_numbers<[1], [0], [0], [1], [0, 0, 1, 1], [], []>} : vector<2x32xf32>, vector<32x32xf32>, vector<2x32xf32> -> vector<2x32xf32>
    %c0_10 = arith.constant 0 : index
    %c0_11 = arith.constant 0 : index
    %13 = vector.load %arg5[%c0_10, %c0_11] : memref<1x32xf32, #tpu.memory_space<vmem>>, vector<1x32xf32>
    %14 = vector.broadcast %13 : vector<1x32xf32> to vector<2x32xf32>
    %15 = arith.addf %12, %14 : vector<2x32xf32>
    %cst_12 = arith.constant 0.000000e+00 : f32
    %16 = vector.broadcast %cst_12 : f32 to vector<2x32xf32>
    %17 = arith.cmpf ogt, %15, %16 : vector<2x32xf32>
    %cst_13 = arith.constant 0.00999999977 : f32
    %18 = vector.broadcast %cst_13 : f32 to vector<2x32xf32>
    %19 = arith.mulf %18, %15 : vector<2x32xf32>
    %20 = arith.select %17, %15, %19 : vector<2x32xi1>, vector<2x32xf32>
    %c0_14 = arith.constant 0 : index
    %c0_15 = arith.constant 0 : index
    %21 = vector.load %arg6[%c0_14, %c0_15] : memref<32x384xf32, #tpu.memory_space<vmem>>, vector<32x384xf32>
    %cst_16 = arith.constant dense<0.000000e+00> : vector<2x384xf32>
    %22 = tpu.matmul %20, %21, %cst_16 {dimension_numbers = #tpu.dot_dimension_numbers<[1], [0], [0], [1], [0, 0, 1, 1], [], []>} : vector<2x32xf32>, vector<32x384xf32>, vector<2x384xf32> -> vector<2x384xf32>
    %c0_17 = arith.constant 0 : index
    %c0_18 = arith.constant 0 : index
    %23 = vector.load %arg7[%c0_17, %c0_18] : memref<1x384xf32, #tpu.memory_space<vmem>>, vector<1x384xf32>
    %24 = vector.broadcast %23 : vector<1x384xf32> to vector<2x384xf32>
    %25 = arith.addf %22, %24 : vector<2x384xf32>
    %26 = arith.negf %25 : vector<2x384xf32>
    %27 = math.exp %26 : vector<2x384xf32>
    %cst_19 = arith.constant 1.000000e+00 : f32
    %28 = vector.broadcast %cst_19 : f32 to vector<2x384xf32>
    %29 = arith.addf %28, %27 : vector<2x384xf32>
    %30 = arith.divf %28, %29 : vector<2x384xf32>
    %c0_20 = arith.constant 0 : index
    %c0_21 = arith.constant 0 : index
    %31 = vector.load %arg8[%c0_20, %c0_21] : memref<2x384xf32, #tpu.memory_space<vmem>>, vector<2x384xf32>
    tpu.vector_store %arg8[%c0_20, %c0_21], %30 {strides = array<i32>} : memref<2x384xf32, #tpu.memory_space<vmem>>, vector<2x384xf32>,
    return
  }
  func.func @transform_0(%arg0: i32) -> (i32, i32) {
    %c0_i32 = arith.constant 0 : i32
    %c0_i32_0 = arith.constant 0 : i32
    %c0_i32_1 = arith.constant 0 : i32
    return %c0_i32, %c0_i32_0 : i32, i32
  }
  func.func @transform_1(%arg0: i32) -> (i32, i32) {
    %c0_i32 = arith.constant 0 : i32
    %c0_i32_0 = arith.constant 0 : i32
    %c0_i32_1 = arith.constant 0 : i32
    return %c0_i32, %c0_i32_0 : i32, i32
  }
  func.func @transform_2(%arg0: i32) -> (i32, i32) {
    %c0_i32 = arith.constant 0 : i32
    %c0_i32_0 = arith.constant 0 : i32
    %c0_i32_1 = arith.constant 0 : i32
    return %c0_i32, %c0_i32_0 : i32, i32
  }
  func.func @transform_3(%arg0: i32) -> (i32, i32) {
    %c0_i32 = arith.constant 0 : i32
    %c0_i32_0 = arith.constant 0 : i32
    %c0_i32_1 = arith.constant 0 : i32
    return %c0_i32, %c0_i32_0 : i32, i32
  }
  func.func @transform_4(%arg0: i32) -> (i32, i32) {
    %c0_i32 = arith.constant 0 : i32
    %c0_i32_0 = arith.constant 0 : i32
    %c0_i32_1 = arith.constant 0 : i32
    return %c0_i32, %c0_i32_0 : i32, i32
  }
  func.func @transform_5(%arg0: i32) -> (i32, i32) {
    %c0_i32 = arith.constant 0 : i32
    %c0_i32_0 = arith.constant 0 : i32
    return %c0_i32, %arg0 : i32, i32
  }
  func.func @transform_6(%arg0: i32) -> (i32, i32) {
    %c0_i32 = arith.constant 0 : i32
    %c0_i32_0 = arith.constant 0 : i32
    return %c0_i32, %arg0 : i32, i32
  }
  func.func @transform_7(%arg0: i32) -> (i32, i32) {
    %c0_i32 = arith.constant 0 : i32
    %c0_i32_0 = arith.constant 0 : i32
    return %c0_i32, %arg0 : i32, i32
  }
}

</mosaic_0001>

<llo_original>
// kernel: tpu_custom_call.1
$region0: #{tpu_custom_call.1}
  #allocation0 [shape = 'u32[]', space=smem, size = 0x4, offset = 0x4, fixed_abs, tag = 'smem constant byte address 0x4 - core index']
  #allocation1 [shape = 'u32[144,128]{1,0:T(1,128)}', space=vmem, size = 0x12000, scoped, tag = 'internal scratch']
  %s0 = inlined_call_operand.hbm [shape: f32[2,32], index: 0, kind: input, shape index: {}]
  %s1 = inlined_call_operand.hbm [shape: f32[32,32], index: 1, kind: input, shape index: {}]
  %s2 = inlined_call_operand.vmem [shape: f32[1,32], index: 2, kind: input, shape index: {}]
  %s3 = inlined_call_operand.hbm [shape: f32[32,32], index: 3, kind: input, shape index: {}]
  %s4 = inlined_call_operand.vmem [shape: f32[1,32], index: 4, kind: input, shape index: {}]
  %s5 = inlined_call_operand.hbm [shape: f32[32,384], index: 5, kind: input, shape index: {}]
  %s6 = inlined_call_operand.vmem [shape: f32[1,384], index: 6, kind: input, shape index: {}]
  %s7 = inlined_call_operand.hbm [shape: f32[2,384], index: 7, kind: output, shape index: {}]
  %s8 = sld [smem:[#allocation0]]
  $region54: #{tpu_custom_call.1} parent=0
    _
  %s10 = ssub.s32 1, %s8
  %s11 = scalar_select 0, %s10, %s8
  $region1: #{tpu_custom_call.1} parent=0
    #allocation2 [shape = 'u8[1024]{0}', space=vmem, size = 0x400, scoped, tag = 'input window, operand 0, single buffered']
    #allocation3 [shape = 's32[1]{0}', space=sflag, size = 0x4, scoped, tag = 'scoped memory for tpu_custom_call.1']
    #allocation4 [shape = 's32[1]{0}', space=sflag, size = 0x4, scoped, tag = 'scoped memory for tpu_custom_call.1']
    #allocation5 [shape = 'u8[16384]{0}', space=vmem, size = 0x4000, scoped, tag = 'input window, operand 1, single buffered']
    #allocation6 [shape = 's32[1]{0}', space=sflag, size = 0x4, scoped, tag = 'scoped memory for tpu_custom_call.1']
    #allocation7 [shape = 'u8[16384]{0}', space=vmem, size = 0x4000, scoped, tag = 'input window, operand 3, single buffered']
    #allocation8 [shape = 'u8[49152]{0}', space=vmem, size = 0xc000, scoped, tag = 'input window, operand 5, single buffered']
    #allocation9 [shape = 's32[1]{0}', space=sflag, size = 0x4, scoped, tag = 'scoped memory for tpu_custom_call.1']
    #allocation10 [shape = 'u8[3072]{0}', space=vmem, size = 0xc00, scoped, tag = 'output window, operand 0, single buffered']
    %12 = vsyncpa [#allocation3], 0
    %13 = vsyncpa [#allocation6], 0
    %14 = vsyncpa [#allocation9], 0
    %15 = vsyncpa [#allocation4], 0
    // Predicated region
    $region2: #{tpu_custom_call.1} parent=1 // pred_check
      _
    $region3: #{tpu_custom_call.1} parent=1 // pred_check_branch
      %17 = sbr.rel (0) target = $region5
    $region4: #{tpu_custom_call.1} parent=1 // pred_region
      %s19 = ssub.s32 32, 32
      %20 = vsyncadd [#allocation3], %s19
      %s22 = sshll.u32 [#allocation2], 4
      %s23 = int_to_ptr.vmem [resolvable:$true] %s22
      %25 = dma.hbm_to_vmem [thread:$0]  %s0, 32, %s23, [#allocation3]
    $region5: #{tpu_custom_call.1} parent=1 // pred_fallthru
      _
    // Predicated region
    $region6: #{tpu_custom_call.1} parent=1 // pred_check
      _
    $region7: #{tpu_custom_call.1} parent=1 // pred_check_branch
      %27 = sbr.rel (0) target = $region9
    $region8: #{tpu_custom_call.1} parent=1 // pred_region
      %s29 = ssub.s32 512, 512
      %30 = vsyncadd [#allocation6], %s29
      %s31 = sshll.u32 [#allocation5], 4
      %s32 = int_to_ptr.vmem [resolvable:$true] %s31
      %37 = dma.hbm_to_vmem [thread:$0]  %s1, 512, %s32, [#allocation6], 128, 128, 8
    $region9: #{tpu_custom_call.1} parent=1 // pred_fallthru
      _
    // Predicated region
    $region10: #{tpu_custom_call.1} parent=1 // pred_check
      _
    $region11: #{tpu_custom_call.1} parent=1 // pred_check_branch
      %39 = sbr.rel (0) target = $region13
    $region12: #{tpu_custom_call.1} parent=1 // pred_region
      _
    $region13: #{tpu_custom_call.1} parent=1 // pred_fallthru
      _
    // Predicated region
    $region14: #{tpu_custom_call.1} parent=1 // pred_check
      _
    $region15: #{tpu_custom_call.1} parent=1 // pred_check_branch
      %41 = sbr.rel (0) target = $region17
    $region16: #{tpu_custom_call.1} parent=1 // pred_region
      %s43 = ssub.s32 512, 512
      %44 = vsyncadd [#allocation6], %s43
      %s45 = sshll.u32 [#allocation7], 4
      %s46 = int_to_ptr.vmem [resolvable:$true] %s45
      %51 = dma.hbm_to_vmem [thread:$0]  %s3, 512, %s46, [#allocation6], 128, 128, 8
    $region17: #{tpu_custom_call.1} parent=1 // pred_fallthru
      _
    // Predicated region
    $region18: #{tpu_custom_call.1} parent=1 // pred_check
      _
    $region19: #{tpu_custom_call.1} parent=1 // pred_check_branch
      %53 = sbr.rel (0) target = $region21
    $region20: #{tpu_custom_call.1} parent=1 // pred_region
      _
    $region21: #{tpu_custom_call.1} parent=1 // pred_fallthru
      _
    // Predicated region
    $region22: #{tpu_custom_call.1} parent=1 // pred_check
      _
    $region23: #{tpu_custom_call.1} parent=1 // pred_check_branch
      %55 = sbr.rel (0) target = $region25
    $region24: #{tpu_custom_call.1} parent=1 // pred_region
      %s57 = ssub.s32 1536, 1536
      %58 = vsyncadd [#allocation9], %s57
      %s59 = sshll.u32 [#allocation8], 4
      %s60 = int_to_ptr.vmem [resolvable:$true] %s59
      %65 = dma.hbm_to_vmem [thread:$0]  %s5, 1536, %s60, [#allocation9], 384, 384, 24
    $region25: #{tpu_custom_call.1} parent=1 // pred_fallthru
      _
    // Predicated region
    $region26: #{tpu_custom_call.1} parent=1 // pred_check
      _
    $region27: #{tpu_custom_call.1} parent=1 // pred_check_branch
      %67 = sbr.rel (0) target = $region29
    $region28: #{tpu_custom_call.1} parent=1 // pred_region
      _
    $region29: #{tpu_custom_call.1} parent=1 // pred_fallthru
      _
    // Predicated region
    $region30: #{tpu_custom_call.1} parent=1 // pred_check
      _
    $region31: #{tpu_custom_call.1} parent=1 // pred_check_branch
      %69 = sbr.rel (0) target = $region33
    $region32: #{tpu_custom_call.1} parent=1 // pred_region
      %70 = dma.done [#allocation3], 32
    $region33: #{tpu_custom_call.1} parent=1 // pred_fallthru
      _
    // Predicated region
    $region34: #{tpu_custom_call.1} parent=1 // pred_check
      _
    $region35: #{tpu_custom_call.1} parent=1 // pred_check_branch
      %72 = sbr.rel (0) target = $region37
    $region36: #{tpu_custom_call.1} parent=1 // pred_region
      %73 = dma.done [#allocation6], 512
    $region37: #{tpu_custom_call.1} parent=1 // pred_fallthru
      _
    // Predicated region
    $region38: #{tpu_custom_call.1} parent=1 // pred_check
      _
    $region39: #{tpu_custom_call.1} parent=1 // pred_check_branch
      %75 = sbr.rel (0) target = $region41
    $region40: #{tpu_custom_call.1} parent=1 // pred_region
      %76 = dma.done [#allocation6], 512
    $region41: #{tpu_custom_call.1} parent=1 // pred_fallthru
      _
    // Predicated region
    $region42: #{tpu_custom_call.1} parent=1 // pred_check
      _
    $region43: #{tpu_custom_call.1} parent=1 // pred_check_branch
      %78 = sbr.rel (0) target = $region45
    $region44: #{tpu_custom_call.1} parent=1 // pred_region
      %79 = dma.done [#allocation9], 1536
    $region45: #{tpu_custom_call.1} parent=1 // pred_fallthru
      _
    %v80 = vld [vmem:[#allocation2] sm:$0x3]
    %v81 = vld [vmem:[#allocation5] sm:$0xff]
    %v82 = vld [vmem:[#allocation5 + $0x8] sm:$0xff]
    %v83 = vld [vmem:[#allocation5 + $0x10] sm:$0xff]
    %v84 = vld [vmem:[#allocation5 + $0x18] sm:$0xff]
    %v85 = vld [vmem:[%s2] sm:$0x1]
    %v87 = vlaneseq
    %v88 = vshrl.u32 %v87, 7
    %v89 = vsub.s32 0, %v88
    %v90 = vrot.slane %v85, %v89
    %vm92 = vcmask 261120
    %v94 = vsel %vm92, %v80, 0
    %96 = vmatprep.subr.mxu0 0.0
    %97 = vmatpush1.msra.mxu0 %v81
    %98 = vmatprep.subr.mxu0 0.0
    %99 = vmatpush1.msra.mxu0 %v82
    %100 = vmatprep.subr.mxu0 0.0
    %101 = vmatpush1.msra.mxu0 %v83
    %102 = vmatprep.subr.mxu0 0.0
    %103 = vmatpush1.msra.mxu0 %v84
    %104 = vmatprep.subr.mxu0 0.0
    %105 = vmatpush1.msra.mxu0 0.0
    %106 = vmatprep.subr.mxu0 0.0
    %107 = vmatpush1.msra.mxu0 0.0
    %108 = vmatprep.subr.mxu0 0.0
    %109 = vmatpush1.msra.mxu0 0.0
    %110 = vmatprep.subr.mxu0 0.0
    %111 = vmatpush1.msra.mxu0 0.0
    %112 = vmatprep.subr.mxu0 0.0
    %113 = vmatpush1.msra.mxu0 0.0
    %114 = vmatprep.subr.mxu0 0.0
    %115 = vmatpush1.msra.mxu0 0.0
    %116 = vmatprep.subr.mxu0 0.0
    %117 = vmatpush1.msra.mxu0 0.0
    %118 = vmatprep.subr.mxu0 0.0
    %119 = vmatpush1.msra.mxu0 0.0
    %120 = vmatprep.subr.mxu0 0.0
    %121 = vmatpush1.msra.mxu0 0.0
    %122 = vmatprep.subr.mxu0 0.0
    %123 = vmatpush1.msra.mxu0 0.0
    %124 = vmatprep.subr.mxu0 0.0
    %125 = vmatpush1.msra.mxu0 0.0
    %126 = vmatprep.subr.mxu0 0.0
    %127 = vmatpush1.msra.mxu0 0.0
    %128 = vmatprep.subr.mxu0 0.0
    %129 = vmatpush1.msra.mxu0 0.0
    %130 = vmatprep.subr.mxu0 0.0
    %131 = vmatpush1.msra.mxu0 0.0
    %132 = vmatprep.subr.mxu0 0.0
    %133 = vmatpush1.msra.mxu0 0.0
    %134 = vmatprep.subr.mxu0 0.0
    %135 = vmatpush1.msra.mxu0 0.0
    %136 = vmatprep.subr.mxu0 0.0
    %137 = vmatpush1.msra.mxu0 0.0
    %138 = vmatprep.subr.mxu0 0.0
    %139 = vmatpush1.msra.mxu0 0.0
    %140 = vmatprep.subr.mxu0 0.0
    %141 = vmatpush1.msra.mxu0 0.0
    %142 = vmatprep.subr.mxu0 0.0
    %143 = vmatpush1.msra.mxu0 0.0
    %144 = vmatprep.subr.mxu0 0.0
    %145 = vmatpush1.msra.mxu0 0.0
    %146 = vmatprep.subr.mxu0 0.0
    %147 = vmatpush1.msra.mxu0 0.0
    %148 = vmatprep.subr.mxu0 0.0
    %149 = vmatpush1.msra.mxu0 0.0
    %150 = vmatprep.subr.mxu0 0.0
    %151 = vmatpush1.msra.mxu0 0.0
    %152 = vmatprep.subr.mxu0 0.0
    %153 = vmatpush1.msra.mxu0 0.0
    %154 = vmatprep.subr.mxu0 0.0
    %155 = vmatpush1.msra.mxu0 0.0
    %156 = vmatprep.subr.mxu0 0.0
    %157 = vmatpush1.msra.mxu0 0.0
    %158 = vmatprep.subr.mxu0 0.0
    %159 = vmatpush1.msra.mxu0 0.0
    %160 = vmatprep.mubr.f32.mxu0 0.0
    %161 = vmatmul.mubr.f32.gmra.mrb[0].mxu0 %v94
    %v162 = vpop.f32.mrb[0].mxu0
    %v163 = vadd.f32 %v90, %v162
    %v164 = vpop.f32.mrb[0].mxu0
    %165 = vdwg.mxu0
    %vm166 = vcmp.gt.f32.partialorder %v163, 0.0
    %v167 = vmul.f32 %v163, 0.01
    %v168 = vsel %vm166, %v163, %v167
    %v169 = vld [vmem:[#allocation7] sm:$0xff]
    %v170 = vld [vmem:[#allocation7 + $0x8] sm:$0xff]
    %v171 = vld [vmem:[#allocation7 + $0x10] sm:$0xff]
    %v172 = vld [vmem:[#allocation7 + $0x18] sm:$0xff]
    %v173 = vld [vmem:[%s4] sm:$0x1]
    %v175 = vlaneseq
    %v176 = vshrl.u32 %v175, 7
    %v177 = vsub.s32 0, %v176
    %v178 = vrot.slane %v173, %v177
    %v181 = vsel %vm92, %v168, 0
    %183 = vmatprep.subr.mxu0 0.0
    %184 = vmatpush1.msra.mxu0 %v169
    %185 = vmatprep.subr.mxu0 0.0
    %186 = vmatpush1.msra.mxu0 %v170
    %187 = vmatprep.subr.mxu0 0.0
    %188 = vmatpush1.msra.mxu0 %v171
    %189 = vmatprep.subr.mxu0 0.0
    %190 = vmatpush1.msra.mxu0 %v172
    %191 = vmatprep.subr.mxu0 0.0
    %192 = vmatpush1.msra.mxu0 0.0
    %193 = vmatprep.subr.mxu0 0.0
    %194 = vmatpush1.msra.mxu0 0.0
    %195 = vmatprep.subr.mxu0 0.0
    %196 = vmatpush1.msra.mxu0 0.0
    %197 = vmatprep.subr.mxu0 0.0
    %198 = vmatpush1.msra.mxu0 0.0
    %199 = vmatprep.subr.mxu0 0.0
    %200 = vmatpush1.msra.mxu0 0.0
    %201 = vmatprep.subr.mxu0 0.0
    %202 = vmatpush1.msra.mxu0 0.0
    %203 = vmatprep.subr.mxu0 0.0
    %204 = vmatpush1.msra.mxu0 0.0
    %205 = vmatprep.subr.mxu0 0.0
    %206 = vmatpush1.msra.mxu0 0.0
    %207 = vmatprep.subr.mxu0 0.0
    %208 = vmatpush1.msra.mxu0 0.0
    %209 = vmatprep.subr.mxu0 0.0
    %210 = vmatpush1.msra.mxu0 0.0
    %211 = vmatprep.subr.mxu0 0.0
    %212 = vmatpush1.msra.mxu0 0.0
    %213 = vmatprep.subr.mxu0 0.0
    %214 = vmatpush1.msra.mxu0 0.0
    %215 = vmatprep.subr.mxu0 0.0
    %216 = vmatpush1.msra.mxu0 0.0
    %217 = vmatprep.subr.mxu0 0.0
    %218 = vmatpush1.msra.mxu0 0.0
    %219 = vmatprep.subr.mxu0 0.0
    %220 = vmatpush1.msra.mxu0 0.0
    %221 = vmatprep.subr.mxu0 0.0
    %222 = vmatpush1.msra.mxu0 0.0
    %223 = vmatprep.subr.mxu0 0.0
    %224 = vmatpush1.msra.mxu0 0.0
    %225 = vmatprep.subr.mxu0 0.0
    %226 = vmatpush1.msra.mxu0 0.0
    %227 = vmatprep.subr.mxu0 0.0
    %228 = vmatpush1.msra.mxu0 0.0
    %229 = vmatprep.subr.mxu0 0.0
    %230 = vmatpush1.msra.mxu0 0.0
    %231 = vmatprep.subr.mxu0 0.0
    %232 = vmatpush1.msra.mxu0 0.0
    %233 = vmatprep.subr.mxu0 0.0
    %234 = vmatpush1.msra.mxu0 0.0
    %235 = vmatprep.subr.mxu0 0.0
    %236 = vmatpush1.msra.mxu0 0.0
    %237 = vmatprep.subr.mxu0 0.0
    %238 = vmatpush1.msra.mxu0 0.0
    %239 = vmatprep.subr.mxu0 0.0
    %240 = vmatpush1.msra.mxu0 0.0
    %241 = vmatprep.subr.mxu0 0.0
    %242 = vmatpush1.msra.mxu0 0.0
    %243 = vmatprep.subr.mxu0 0.0
    %244 = vmatpush1.msra.mxu0 0.0
    %245 = vmatprep.subr.mxu0 0.0
    %246 = vmatpush1.msra.mxu0 0.0
    %247 = vmatprep.mubr.f32.mxu0 0.0
    %248 = vmatmul.mubr.f32.gmra.mrb[0].mxu0 %v181
    %v249 = vpop.f32.mrb[0].mxu0
    %v250 = vadd.f32 %v178, %v249
    %v251 = vpop.f32.mrb[0].mxu0
    %252 = vdwg.mxu0
    %vm253 = vcmp.gt.f32.partialorder %v250, 0.0
    %v254 = vmul.f32 %v250, 0.01
    %v255 = vsel %vm253, %v250, %v254
    %v256 = vld [vmem:[#allocation8] sm:$0xff]
    %v257 = vld [vmem:[#allocation8 + $0x8] sm:$0xff]
    %v258 = vld [vmem:[#allocation8 + $0x10] sm:$0xff]
    %v259 = vld [vmem:[#allocation8 + $0x18] sm:$0xff]
    %v260 = vld [vmem:[#allocation8 + $0x20] sm:$0xff]
    %v261 = vld [vmem:[#allocation8 + $0x28] sm:$0xff]
    %v262 = vld [vmem:[#allocation8 + $0x30] sm:$0xff]
    %v263 = vld [vmem:[#allocation8 + $0x38] sm:$0xff]
    %v264 = vld [vmem:[#allocation8 + $0x40] sm:$0xff]
    %v265 = vld [vmem:[#allocation8 + $0x48] sm:$0xff]
    %v266 = vld [vmem:[#allocation8 + $0x50] sm:$0xff]
    %v267 = vld [vmem:[#allocation8 + $0x58] sm:$0xff]
    %v268 = vld [vmem:[%s6] sm:$0x7]
    %v270 = vlaneseq
    %v271 = vshrl.u32 %v270, 7
    %v272 = vsub.s32 0, %v271
    %v273 = vrot.slane %v268, %v272
    %v274 = vlaneseq
    %v275 = vshrl.u32 %v274, 7
    %v276 = vsub.s32 1, %v275
    %v277 = vrot.slane %v268, %v276
    %v278 = vlaneseq
    %v279 = vshrl.u32 %v278, 7
    %v280 = vsub.s32 2, %v279
    %v281 = vrot.slane %v268, %v280
    %v286 = vsel %vm92, %v255, 0
    %288 = vmatprep.subr.mxu0 %v257
    %289 = vmatpush1.msra.mxu0 %v256
    %290 = vmatprep.subr.mxu0 %v260
    %291 = vmatpush1.msra.mxu0 %v259
    %292 = vmatprep.subr.mxu0 %v263
    %293 = vmatpush1.msra.mxu0 %v262
    %294 = vmatprep.subr.mxu0 %v266
    %295 = vmatpush1.msra.mxu0 %v265
    %296 = vmatprep.subr.mxu0 0.0
    %297 = vmatpush1.msra.mxu0 0.0
    %298 = vmatprep.subr.mxu0 0.0
    %299 = vmatpush1.msra.mxu0 0.0
    %300 = vmatprep.subr.mxu0 0.0
    %301 = vmatpush1.msra.mxu0 0.0
    %302 = vmatprep.subr.mxu0 0.0
    %303 = vmatpush1.msra.mxu0 0.0
    %304 = vmatprep.subr.mxu0 0.0
    %305 = vmatpush1.msra.mxu0 0.0
    %306 = vmatprep.subr.mxu0 0.0
    %307 = vmatpush1.msra.mxu0 0.0
    %308 = vmatprep.subr.mxu0 0.0
    %309 = vmatpush1.msra.mxu0 0.0
    %310 = vmatprep.subr.mxu0 0.0
    %311 = vmatpush1.msra.mxu0 0.0
    %312 = vmatprep.subr.mxu0 0.0
    %313 = vmatpush1.msra.mxu0 0.0
    %314 = vmatprep.subr.mxu0 0.0
    %315 = vmatpush1.msra.mxu0 0.0
    %316 = vmatprep.subr.mxu0 0.0
    %317 = vmatpush1.msra.mxu0 0.0
    %318 = vmatprep.subr.mxu0 0.0
    %319 = vmatpush1.msra.mxu0 0.0
    %320 = vmatprep.subr.mxu0 0.0
    %321 = vmatpush1.msra.mxu0 0.0
    %322 = vmatprep.subr.mxu0 0.0
    %323 = vmatpush1.msra.mxu0 0.0
    %324 = vmatprep.subr.mxu0 0.0
    %325 = vmatpush1.msra.mxu0 0.0
    %326 = vmatprep.subr.mxu0 0.0
    %327 = vmatpush1.msra.mxu0 0.0
    %328 = vmatprep.subr.mxu0 0.0
    %329 = vmatpush1.msra.mxu0 0.0
    %330 = vmatprep.subr.mxu0 0.0
    %331 = vmatpush1.msra.mxu0 0.0
    %332 = vmatprep.subr.mxu0 0.0
    %333 = vmatpush1.msra.mxu0 0.0
    %334 = vmatprep.subr.mxu0 0.0
    %335 = vmatpush1.msra.mxu0 0.0
    %336 = vmatprep.subr.mxu0 0.0
    %337 = vmatpush1.msra.mxu0 0.0
    %338 = vmatprep.subr.mxu0 0.0
    %339 = vmatpush1.msra.mxu0 0.0
    %340 = vmatprep.subr.mxu0 0.0
    %341 = vmatpush1.msra.mxu0 0.0
    %342 = vmatprep.subr.mxu0 0.0
    %343 = vmatpush1.msra.mxu0 0.0
    %344 = vmatprep.subr.mxu0 0.0
    %345 = vmatpush1.msra.mxu0 0.0
    %346 = vmatprep.subr.mxu0 0.0
    %347 = vmatpush1.msra.mxu0 0.0
    %348 = vmatprep.subr.mxu0 0.0
    %349 = vmatpush1.msra.mxu0 0.0
    %350 = vmatprep.subr.mxu0 0.0
    %351 = vmatpush1.msra.mxu0 0.0
    %352 = vmatprep.mubr.f32.mxu0 0.0
    %353 = vmatmul.mubr.f32.gmra.mrb[0].mxu0 %v286
    %v354 = vpop.f32.mrb[0].mxu0
    %v355 = vadd.f32 %v273, %v354
    %v356 = vpop.f32.mrb[0].mxu0
    %v357 = vadd.f32 %v277, %v356
    %358 = vdwg.mxu0
    %359 = vmatprep.subr.mxu0 0.0
    %360 = vmatpush1.msra.mxu0 %v258
    %361 = vmatprep.subr.mxu0 0.0
    %362 = vmatpush1.msra.mxu0 %v261
    %363 = vmatprep.subr.mxu0 0.0
    %364 = vmatpush1.msra.mxu0 %v264
    %365 = vmatprep.subr.mxu0 0.0
    %366 = vmatpush1.msra.mxu0 %v267
    %367 = vmatprep.subr.mxu0 0.0
    %368 = vmatpush1.msra.mxu0 0.0
    %369 = vmatprep.subr.mxu0 0.0
    %370 = vmatpush1.msra.mxu0 0.0
    %371 = vmatprep.subr.mxu0 0.0
    %372 = vmatpush1.msra.mxu0 0.0
    %373 = vmatprep.subr.mxu0 0.0
    %374 = vmatpush1.msra.mxu0 0.0
    %375 = vmatprep.subr.mxu0 0.0
    %376 = vmatpush1.msra.mxu0 0.0
    %377 = vmatprep.subr.mxu0 0.0
    %378 = vmatpush1.msra.mxu0 0.0
    %379 = vmatprep.subr.mxu0 0.0
    %380 = vmatpush1.msra.mxu0 0.0
    %381 = vmatprep.subr.mxu0 0.0
    %382 = vmatpush1.msra.mxu0 0.0
    %383 = vmatprep.subr.mxu0 0.0
    %384 = vmatpush1.msra.mxu0 0.0
    %385 = vmatprep.subr.mxu0 0.0
    %386 = vmatpush1.msra.mxu0 0.0
    %387 = vmatprep.subr.mxu0 0.0
    %388 = vmatpush1.msra.mxu0 0.0
    %389 = vmatprep.subr.mxu0 0.0
    %390 = vmatpush1.msra.mxu0 0.0
    %391 = vmatprep.subr.mxu0 0.0
    %392 = vmatpush1.msra.mxu0 0.0
    %393 = vmatprep.subr.mxu0 0.0
    %394 = vmatpush1.msra.mxu0 0.0
    %395 = vmatprep.subr.mxu0 0.0
    %396 = vmatpush1.msra.mxu0 0.0
    %397 = vmatprep.subr.mxu0 0.0
    %398 = vmatpush1.msra.mxu0 0.0
    %399 = vmatprep.subr.mxu0 0.0
    %400 = vmatpush1.msra.mxu0 0.0
    %401 = vmatprep.subr.mxu0 0.0
    %402 = vmatpush1.msra.mxu0 0.0
    %403 = vmatprep.subr.mxu0 0.0
    %404 = vmatpush1.msra.mxu0 0.0
    %405 = vmatprep.subr.mxu0 0.0
    %406 = vmatpush1.msra.mxu0 0.0
    %407 = vmatprep.subr.mxu0 0.0
    %408 = vmatpush1.msra.mxu0 0.0
    %409 = vmatprep.subr.mxu0 0.0
    %410 = vmatpush1.msra.mxu0 0.0
    %411 = vmatprep.subr.mxu0 0.0
    %412 = vmatpush1.msra.mxu0 0.0
    %413 = vmatprep.subr.mxu0 0.0
    %414 = vmatpush1.msra.mxu0 0.0
    %415 = vmatprep.subr.mxu0 0.0
    %416 = vmatpush1.msra.mxu0 0.0
    %417 = vmatprep.subr.mxu0 0.0
    %418 = vmatpush1.msra.mxu0 0.0
    %419 = vmatprep.subr.mxu0 0.0
    %420 = vmatpush1.msra.mxu0 0.0
    %421 = vmatprep.subr.mxu0 0.0
    %422 = vmatpush1.msra.mxu0 0.0
    %423 = vmatprep.mubr.f32.mxu0 0.0
    %424 = vmatmul.mubr.f32.gmra.mrb[0].mxu0 %v286
    %v425 = vpop.f32.mrb[0].mxu0
    %v426 = vadd.f32 %v281, %v425
    %v427 = vpop.f32.mrb[0].mxu0
    %428 = vdwg.mxu0
    %v429 = vxor.u32 %v355, 2147483648
    %v430 = vxor.u32 %v357, 2147483648
    %v431 = vxor.u32 %v426, 2147483648
    %v432 = vmul.f32 %v429, 1.442695
    %v433 = vpow.pop %v432
    %v434 = vmul.f32 %v430, 1.442695
    %v435 = vpow.pop %v434
    %v436 = vmul.f32 %v431, 1.442695
    %v437 = vpow.pop %v436
    %v438 = vadd.f32 %v433, 1.0
    %v439 = vadd.f32 %v435, 1.0
    %v440 = vadd.f32 %v437, 1.0
    %v441 = vrcp.pop %v438
    %v442 = vmul.f32 1.0, %v441
    %v443 = vrcp.pop %v439
    %v444 = vmul.f32 1.0, %v443
    %v445 = vrcp.pop %v440
    %v446 = vmul.f32 1.0, %v445
    %v450 = vcombine.low %v442, %v444
    %v452 = vunpack.c.l.s4 1983009808
    %v453 = vunpack.c.0.s8 %v452
    %v454 = vlaneseq
    %v455 = vshrl.u32 %v454, 7
    %v456 = vsub.s32 %v453, %v455
    %v457 = vrot.slane %v450, %v456
    %v459 = vunpack.c.l.s4 1983009808
    %v460 = vunpack.c.0.s8 %v459
    %v461 = vlaneseq
    %v462 = vshrl.u32 %v461, 7
    %v463 = vsub.s32 %v460, %v462
    %v464 = vrot.slane %v446, %v463
    %v465 = vcombine.low %v457, %v464
    %467 = vst [vmem:[#allocation10] sm:$0x3f] %v465
    // Predicated region
    $region46: #{tpu_custom_call.1} parent=1 // pred_check
      _
    $region47: #{tpu_custom_call.1} parent=1 // pred_check_branch
      %469 = sbr.rel (0) target = $region49
    $region48: #{tpu_custom_call.1} parent=1 // pred_region
      %s471 = ssub.s32 96, 96
      %472 = vsyncadd [#allocation4], %s471
      %s474 = sshll.u32 [#allocation10], 4
      %s475 = int_to_ptr.vmem [resolvable:$true] %s474
      %477 = dma.vmem_to_hbm [thread:$0]  %s475, 96, %s7, [#allocation4]
    $region49: #{tpu_custom_call.1} parent=1 // pred_fallthru
      _
    // Predicated region
    $region50: #{tpu_custom_call.1} parent=1 // pred_check
      _
    $region51: #{tpu_custom_call.1} parent=1 // pred_check_branch
      %479 = sbr.rel (0) target = $region53
    $region52: #{tpu_custom_call.1} parent=1 // pred_region
      %480 = dma.done [#allocation4], 96
    $region53: #{tpu_custom_call.1} parent=1 // pred_fallthru
      _
    %481 = vsyncpa [#allocation3], 1
    %482 = vsyncpa [#allocation6], 1
    %483 = vsyncpa [#allocation9], 1
    %484 = vsyncpa [#allocation4], 1

</llo_original>
